<compile_context>
chip_gen: v6e
topology: v6e:2x2x1
jax: 0.10.0
libtpu: 0.0.40
codegen_flags: <defaults>
</compile_context>

<pallas_src>
import functools

import jax
import jax.numpy as jnp
from jax.experimental import pallas as pl
from jax.experimental.pallas import tpu as pltpu

_LANE = 128


def _round_up(x, m):
    return ((x + m - 1) // m) * m


def _min_batch_tile(dtype):
    # Minimum second-to-last tile: 8 rows of 32-bit; sub-32-bit packs along sublanes.
    return 8 * max(1, 4 // jnp.dtype(dtype).itemsize)


def _vmem_capacity_bytes():
    """Per-core VMEM capacity; conservative fallback if the query is unavailable."""
    try:
        info = pltpu.get_tpu_info()
        cap = getattr(info, "vmem_capacity_bytes", None)
        if cap:
            return int(cap)
    except Exception:
        pass
    return 64 << 20  # v7x per-TC VMEM (most restrictive generation)


# --------------------------------------------------------------------------- #
# Kernel
# --------------------------------------------------------------------------- #
def _vae_decoder_kernel(xz_ref, w1_ref, b1_ref, w2_ref, b2_ref, wf_ref, bf_ref,
                        out_ref, *, with_squash):
    """One batch tile of the full forward pass.

    xz  : [TB, in_dim]      (compute_dtype)   in_dim = obs_dim + latent_dim
    w1  : [in_dim, Hp]      b1: [1, Hp]  (f32)
    w2  : [Hp, Hp]          b2: [1, Hp]  (f32)
    wf  : [Hp, A]           bf: [1, A]   (f32)
    out : [TB, A]
    """
    # layer 1 (single merged dot over the concatenated input)
    h = jnp.dot(xz_ref[...], w1_ref[...], preferred_element_type=jnp.float32)
    h = jnp.maximum(h + b1_ref[...], 0.0)                       # f32 elementwise

    # layer 2
    h = jnp.dot(h.astype(w2_ref.dtype), w2_ref[...],
                preferred_element_type=jnp.float32) + b2_ref[...]
    h = jnp.maximum(h, 0.0)

    # final fc (narrow output: only the live action columns are computed/stored)
    y = jnp.dot(h.astype(wf_ref.dtype), wf_ref[...],
                preferred_element_type=jnp.float32) + bf_ref[...]

    # NOTE: matches the PyTorch module: tanh is applied only when with_squash=False.
    if not with_squash:
        y = jnp.tanh(y)

    out_ref[...] = y.astype(out_ref.dtype)


# --------------------------------------------------------------------------- #
# Wrapper
# --------------------------------------------------------------------------- #
def prepare_vae_decoder_params(params, compute_dtype=jnp.bfloat16):
    """Pad/cast weights once (hoisted out of the per-call path).

    params: w1 [obs+lat, H], b1 [1, H], w2 [H, H], b2 [1, H], wf [H, A], bf [1, A]
    Hidden dim is zero-padded to a multiple of 128 (exact: padded channels stay 0).
    The action dim is NOT padded (narrow output writeback).
    """
    in_dim, H = params["w1"].shape
    A = params["wf"].shape[1]
    Hp = _round_up(H, _LANE)
    padH = Hp - H
    prepared = dict(
        w1=jnp.pad(params["w1"], ((0, 0), (0, padH))).astype(compute_dtype),
        b1=jnp.pad(params["b1"], ((0, 0), (0, padH))).astype(jnp.float32),
        w2=jnp.pad(params["w2"], ((0, padH), (0, padH))).astype(compute_dtype),
        b2=jnp.pad(params["b2"], ((0, 0), (0, padH))).astype(jnp.float32),
        wf=jnp.pad(params["wf"], ((0, padH), (0, 0))).astype(compute_dtype),
        bf=params["bf"].astype(jnp.float32),
    )
    meta = dict(in_dim=in_dim, hidden=H, hidden_padded=Hp, action=A,
                compute_dtype=compute_dtype)
    return prepared, meta


def vae_decoder_forward(x, latent, prepared, meta, with_squash=True,
                        out_dtype=None, batch_tile=1024):
    """Pallas-backed VAEDecoder forward.

    x:      [B, obs_dim]
    latent: [B, latent_dim]
    prepared/meta: output of prepare_vae_decoder_params.
    """
    B = x.shape[0]
    in_dim = meta["in_dim"]
    Hp = meta["hidden_padded"]
    A = meta["action"]
    compute_dtype = meta["compute_dtype"]
    out_dtype = out_dtype if out_dtype is not None else x.dtype
    assert x.shape[1] + latent.shape[1] == in_dim

    wbytes = jnp.dtype(compute_dtype).itemsize
    obytes = jnp.dtype(out_dtype).itemsize
    min_tile = _min_batch_tile(compute_dtype)

    # ---- generation-aware VMEM target (e.g. ~54 MiB on v7x, 100 MiB on v5e/v6e) --
    vmem_target = min(int(0.85 * _vmem_capacity_bytes()), 100 << 20)

    # Resident weights (double-buffered by the default pipeliner) + margin.
    resident = ((in_dim + Hp) * Hp + Hp * A) * wbytes + (2 * Hp + A) * 4
    resident_vmem = 2 * resident
    margin = 4 << 20

    # ---- VMEM-driven batch tile ------------------------------------------------
    # per-row bytes: double-buffered input/output tiles + live f32 [TB, Hp] interm.
    per_row = 2 * (in_dim * wbytes + A * obytes) + 3 * Hp * 4
    budget = max(vmem_target - resident_vmem - margin, min_tile * per_row)
    TB = min(int(batch_tile), budget // per_row)
    TB = min(TB, _round_up(B, min_tile))
    # v7x: keep >=2 grid steps (when the batch allows) so the ("parallel",) axis
    # actually shards across both TensorCores; no-op for tiny batches.
    if _round_up(B, min_tile) >= 2 * min_tile:
        TB = min(TB, _round_up(pl.cdiv(B, 2), min_tile))
    TB = max(min_tile, (TB // min_tile) * min_tile)
    Bp = _round_up(B, TB)

    # Concat once in the wrapper (tiny, in_dim columns) -> single layer-1 dot.
    xz = jnp.concatenate([x, latent], axis=-1).astype(compute_dtype)
    if Bp != B:
        xz = jnp.pad(xz, ((0, Bp - B), (0, 0)))

    vmem_limit = int(min(max(resident_vmem + TB * per_row + margin, 16 << 20),
                         vmem_target))

    kernel = functools.partial(_vae_decoder_kernel, with_squash=with_squash)
    resident_spec = lambda a: pl.BlockSpec(a.shape, lambda i: (0,) * a.ndim)

    out = pl.pallas_call(
        kernel,
        out_shape=jax.ShapeDtypeStruct((Bp, A), out_dtype),
        grid=(Bp // TB,),
        in_specs=[
            pl.BlockSpec((TB, in_dim), lambda i: (i, 0)),        # [x ; latent] tile
            resident_spec(prepared["w1"]), resident_spec(prepared["b1"]),
            resident_spec(prepared["w2"]), resident_spec(prepared["b2"]),
            resident_spec(prepared["wf"]), resident_spec(prepared["bf"]),
        ],
        out_specs=pl.BlockSpec((TB, A), lambda i: (i, 0)),
        compiler_params=pltpu.CompilerParams(
            dimension_semantics=("parallel",),
            vmem_limit_bytes=vmem_limit,
        ),
    )(xz, prepared["w1"], prepared["b1"], prepared["w2"], prepared["b2"],
      prepared["wf"], prepared["bf"])

    # Skip the trailing slice entirely when no batch padding was added.
    return out if Bp == B else out[:B]


# --------------------------------------------------------------------------- #
# Reference / init helpers
# --------------------------------------------------------------------------- #
def init_params(key, obs_dim, latent_dim, hidden_size, action_size):
    """Deterministic PyTorch-style (uniform +/- 1/sqrt(fan_in)) init."""
    def linear(k, fan_in, fan_out):
        kw, kb = jax.random.split(k)
        bound = 1.0 / jnp.sqrt(float(fan_in))
        w = jax.random.uniform(kw, (fan_in, fan_out), jnp.float32, -bound, bound)
        b = jax.random.uniform(kb, (1, fan_out), jnp.float32, -bound, bound)
        return w, b

    k1, k2, k3 = jax.random.split(key, 3)
    in_dim = obs_dim + latent_dim
    w1, b1 = linear(k1, in_dim, hidden_size)
    w2, b2 = linear(k2, hidden_size, hidden_size)
    wf, bf = linear(k3, hidden_size, action_size)
    return dict(w1=w1, b1=b1, w2=w2, b2=b2, wf=wf, bf=bf)


def _reference_forward(x, latent, params, with_squash=True):
    z = jnp.concatenate([x, latent], axis=-1)
    h = jnp.maximum(z @ params["w1"] + params["b1"], 0.0)
    h = jnp.maximum(h @ params["w2"] + params["b2"], 0.0)
    y = h @ params["wf"] + params["bf"]
    return y if with_squash else jnp.tanh(y)


if __name__ == "__main__":
    obs_dim = 16
    action_size = 4
    latent_dim = 2 * action_size   # d3rlpy convention: latent_size = 2 * action_size
    hidden_size = 32

    key = jax.random.PRNGKey(0)
    kx, kl, kp = jax.random.split(key, 3)
    params = init_params(kp, obs_dim, latent_dim, hidden_size, action_size)

    # Prepare padded/cast weights once per compute dtype (hoisted out of forward).
    prep_f32, meta_f32 = prepare_vae_decoder_params(params, jnp.float32)
    prep_bf16, meta_bf16 = prepare_vae_decoder_params(params, jnp.bfloat16)

    # B=2: single-step grid; B=64: multi-step grid (exercises batch tiling path).
    for B in (2, 64):
        x = jax.random.normal(jax.random.fold_in(kx, B), (B, obs_dim), jnp.float32)
        latent = jax.random.normal(jax.random.fold_in(kl, B), (B, latent_dim),
                                   jnp.float32)
        ref = _reference_forward(x, latent, params, with_squash=True)
        ref_tanh = _reference_forward(x, latent, params, with_squash=False)

        # f32 compute path (bit-equivalent semantics, tight check)
        out_f32 = jax.block_until_ready(
            vae_decoder_forward(x, latent, prep_f32, meta_f32, with_squash=True))
        out_f32_tanh = jax.block_until_ready(
            vae_decoder_forward(x, latent, prep_f32, meta_f32, with_squash=False))
        assert out_f32.shape == (B, action_size)
        assert jnp.allclose(out_f32, ref, atol=1e-5, rtol=1e-5)
        assert jnp.allclose(out_f32_tanh, ref_tanh, atol=1e-5, rtol=1e-5)

        # bf16-MXU fast path (f32 accumulation + f32 elementwise), loose check
        out_bf16 = jax.block_until_ready(
            vae_decoder_forward(x, latent, prep_bf16, meta_bf16, with_squash=True))
        out_bf16_tanh = jax.block_until_ready(
            vae_decoder_forward(x, latent, prep_bf16, meta_bf16, with_squash=False))
        assert out_bf16.shape == (B, action_size)
        assert jnp.allclose(out_bf16, ref, atol=3e-2, rtol=3e-2)
        assert jnp.allclose(out_bf16_tanh, ref_tanh, atol=3e-2, rtol=3e-2)

    print("KERNEL_OK")
</pallas_src>

<mosaic_0001>
module attributes {stable_mosaic.version = 11 : i64} {
  func.func @_vae_decoder_kernel(%arg0: i32, %arg1: memref<8x24xf32, #tpu.memory_space<vmem>>, %arg2: memref<24x128xf32, #tpu.memory_space<vmem>>, %arg3: memref<1x128xf32, #tpu.memory_space<vmem>>, %arg4: memref<128x128xf32, #tpu.memory_space<vmem>>, %arg5: memref<1x128xf32, #tpu.memory_space<vmem>>, %arg6: memref<128x4xf32, #tpu.memory_space<vmem>>, %arg7: memref<1x4xf32, #tpu.memory_space<vmem>>, %arg8: memref<8x4xf32, #tpu.memory_space<vmem>>) attributes {dimension_semantics = [#tpu.dimension_semantics<parallel>], iteration_bounds = array<i64: 1>, scalar_prefetch = 0 : i64, scratch_operands = 0 : i64, tpu.core_type = #tpu.core_type<tc>, window_params = [{transform_indices = @transform_0, window_bounds = array<i64: 8, 24>}, {pipeline_mode = #tpu.pipeline_mode<synchronous>, transform_indices = @transform_1, window_bounds = array<i64: 24, 128>}, {pipeline_mode = #tpu.pipeline_mode<synchronous>, transform_indices = @transform_2, window_bounds = array<i64: 1, 128>}, {pipeline_mode = #tpu.pipeline_mode<synchronous>, transform_indices = @transform_3, window_bounds = array<i64: 128, 128>}, {pipeline_mode = #tpu.pipeline_mode<synchronous>, transform_indices = @transform_4, window_bounds = array<i64: 1, 128>}, {pipeline_mode = #tpu.pipeline_mode<synchronous>, transform_indices = @transform_5, window_bounds = array<i64: 128, 4>}, {pipeline_mode = #tpu.pipeline_mode<synchronous>, transform_indices = @transform_6, window_bounds = array<i64: 1, 4>}, {transform_indices = @transform_7, window_bounds = array<i64: 8, 4>}]} {
    %c0 = arith.constant 0 : index
    %c0_0 = arith.constant 0 : index
    %0 = vector.load %arg1[%c0, %c0_0] : memref<8x24xf32, #tpu.memory_space<vmem>>, vector<8x24xf32>
    %c0_1 = arith.constant 0 : index
    %c0_2 = arith.constant 0 : index
    %1 = vector.load %arg2[%c0_1, %c0_2] : memref<24x128xf32, #tpu.memory_space<vmem>>, vector<24x128xf32>
    %cst = arith.constant dense<0.000000e+00> : vector<8x128xf32>
    %2 = tpu.matmul %0, %1, %cst {dimension_numbers = #tpu.dot_dimension_numbers<[1], [0], [0], [1], [0, 0, 1, 1], [], []>} : vector<8x24xf32>, vector<24x128xf32>, vector<8x128xf32> -> vector<8x128xf32>
    %c0_3 = arith.constant 0 : index
    %c0_4 = arith.constant 0 : index
    %3 = vector.load %arg3[%c0_3, %c0_4] : memref<1x128xf32, #tpu.memory_space<vmem>>, vector<1x128xf32>
    %4 = vector.broadcast %3 : vector<1x128xf32> to vector<8x128xf32>
    %5 = arith.addf %2, %4 : vector<8x128xf32>
    %cst_5 = arith.constant 0.000000e+00 : f32
    %6 = vector.broadcast %cst_5 : f32 to vector<8x128xf32>
    %7 = arith.maximumf %5, %6 : vector<8x128xf32>
    %c0_6 = arith.constant 0 : index
    %c0_7 = arith.constant 0 : index
    %8 = vector.load %arg4[%c0_6, %c0_7] : memref<128x128xf32, #tpu.memory_space<vmem>>, vector<128x128xf32>
    %cst_8 = arith.constant dense<0.000000e+00> : vector<8x128xf32>
    %9 = tpu.matmul %7, %8, %cst_8 {dimension_numbers = #tpu.dot_dimension_numbers<[1], [0], [0], [1], [0, 0, 1, 1], [], []>} : vector<8x128xf32>, vector<128x128xf32>, vector<8x128xf32> -> vector<8x128xf32>
    %c0_9 = arith.constant 0 : index
    %c0_10 = arith.constant 0 : index
    %10 = vector.load %arg5[%c0_9, %c0_10] : memref<1x128xf32, #tpu.memory_space<vmem>>, vector<1x128xf32>
    %11 = vector.broadcast %10 : vector<1x128xf32> to vector<8x128xf32>
    %12 = arith.addf %9, %11 : vector<8x128xf32>
    %cst_11 = arith.constant 0.000000e+00 : f32
    %13 = vector.broadcast %cst_11 : f32 to vector<8x128xf32>
    %14 = arith.maximumf %12, %13 : vector<8x128xf32>
    %c0_12 = arith.constant 0 : index
    %c0_13 = arith.constant 0 : index
    %15 = vector.load %arg6[%c0_12, %c0_13] : memref<128x4xf32, #tpu.memory_space<vmem>>, vector<128x4xf32>
    %cst_14 = arith.constant dense<0.000000e+00> : vector<8x4xf32>
    %16 = tpu.matmul %14, %15, %cst_14 {dimension_numbers = #tpu.dot_dimension_numbers<[1], [0], [0], [1], [0, 0, 1, 1], [], []>} : vector<8x128xf32>, vector<128x4xf32>, vector<8x4xf32> -> vector<8x4xf32>
    %c0_15 = arith.constant 0 : index
    %c0_16 = arith.constant 0 : index
    %17 = vector.load %arg7[%c0_15, %c0_16] : memref<1x4xf32, #tpu.memory_space<vmem>>, vector<1x4xf32>
    %18 = vector.broadcast %17 : vector<1x4xf32> to vector<8x4xf32>
    %19 = arith.addf %16, %18 : vector<8x4xf32>
    %c0_17 = arith.constant 0 : index
    %c0_18 = arith.constant 0 : index
    %20 = vector.load %arg8[%c0_17, %c0_18] : memref<8x4xf32, #tpu.memory_space<vmem>>, vector<8x4xf32>
    tpu.vector_store %arg8[%c0_17, %c0_18], %19 {strides = array<i32>} : memref<8x4xf32, #tpu.memory_space<vmem>>, vector<8x4xf32>,
    return
  }
  func.func @transform_0(%arg0: i32) -> (i32, i32) {
    %c0_i32 = arith.constant 0 : i32
    %c0_i32_0 = arith.constant 0 : i32
    return %arg0, %c0_i32 : i32, i32
  }
  func.func @transform_1(%arg0: i32) -> (i32, i32) {
    %c0_i32 = arith.constant 0 : i32
    %c0_i32_0 = arith.constant 0 : i32
    %c0_i32_1 = arith.constant 0 : i32
    return %c0_i32, %c0_i32_0 : i32, i32
  }
  func.func @transform_2(%arg0: i32) -> (i32, i32) {
    %c0_i32 = arith.constant 0 : i32
    %c0_i32_0 = arith.constant 0 : i32
    %c0_i32_1 = arith.constant 0 : i32
    return %c0_i32, %c0_i32_0 : i32, i32
  }
  func.func @transform_3(%arg0: i32) -> (i32, i32) {
    %c0_i32 = arith.constant 0 : i32
    %c0_i32_0 = arith.constant 0 : i32
    %c0_i32_1 = arith.constant 0 : i32
    return %c0_i32, %c0_i32_0 : i32, i32
  }
  func.func @transform_4(%arg0: i32) -> (i32, i32) {
    %c0_i32 = arith.constant 0 : i32
    %c0_i32_0 = arith.constant 0 : i32
    %c0_i32_1 = arith.constant 0 : i32
    return %c0_i32, %c0_i32_0 : i32, i32
  }
  func.func @transform_5(%arg0: i32) -> (i32, i32) {
    %c0_i32 = arith.constant 0 : i32
    %c0_i32_0 = arith.constant 0 : i32
    %c0_i32_1 = arith.constant 0 : i32
    return %c0_i32, %c0_i32_0 : i32, i32
  }
  func.func @transform_6(%arg0: i32) -> (i32, i32) {
    %c0_i32 = arith.constant 0 : i32
    %c0_i32_0 = arith.constant 0 : i32
    %c0_i32_1 = arith.constant 0 : i32
    return %c0_i32, %c0_i32_0 : i32, i32
  }
  func.func @transform_7(%arg0: i32) -> (i32, i32) {
    %c0_i32 = arith.constant 0 : i32
    %c0_i32_0 = arith.constant 0 : i32
    return %arg0, %c0_i32 : i32, i32
  }
}

</mosaic_0001>

<llo_original>
// kernel: tpu_custom_call.1
$region0: #{tpu_custom_call.1}
  #allocation0 [shape = 'u32[]', space=smem, size = 0x4, offset = 0x4, fixed_abs, tag = 'smem constant byte address 0x4 - core index']
  #allocation1 [shape = 'u32[144,128]{1,0:T(1,128)}', space=vmem, size = 0x12000, scoped, tag = 'internal scratch']
  %s0 = inlined_call_operand.vmem [shape: f32[8,24], index: 0, kind: input, shape index: {}]
  %s1 = inlined_call_operand.hbm [shape: f32[24,128], index: 1, kind: input, shape index: {}]
  %s2 = inlined_call_operand.vmem [shape: f32[1,128], index: 2, kind: input, shape index: {}]
  %s3 = inlined_call_operand.vmem [shape: f32[128,128], index: 3, kind: input, shape index: {}]
  %s4 = inlined_call_operand.hbm [shape: f32[1,128], index: 4, kind: input, shape index: {}]
  %s5 = inlined_call_operand.vmem [shape: f32[128,4], index: 5, kind: input, shape index: {}]
  %s6 = inlined_call_operand.vmem [shape: f32[1,4], index: 6, kind: input, shape index: {}]
  %s7 = inlined_call_operand.vmem [shape: f32[8,4], index: 7, kind: output, shape index: {}]
  %s8 = sld [smem:[#allocation0]]
  $region46: #{tpu_custom_call.1} parent=0
    _
  %s10 = ssub.s32 1, %s8
  %s11 = scalar_select 0, %s10, %s8
  $region1: #{tpu_custom_call.1} parent=0
    #allocation2 [shape = 'u8[12288]{0}', space=vmem, size = 0x3000, scoped, tag = 'input window, operand 1, single buffered']
    #allocation3 [shape = 's32[1]{0}', space=sflag, size = 0x4, scoped, tag = 'scoped memory for tpu_custom_call.1']
    #allocation4 [shape = 'u8[512]{0}', space=vmem, size = 0x400, scoped, tag = 'input window, operand 4, single buffered']
    #allocation5 [shape = 's32[1]{0}', space=sflag, size = 0x4, scoped, tag = 'scoped memory for tpu_custom_call.1']
    %12 = vsyncpa [#allocation3], 0
    %13 = vsyncpa [#allocation5], 0
    // Predicated region
    $region2: #{tpu_custom_call.1} parent=1 // pred_check
      _
    $region3: #{tpu_custom_call.1} parent=1 // pred_check_branch
      %15 = sbr.rel (0) target = $region5
    $region4: #{tpu_custom_call.1} parent=1 // pred_region
      _
    $region5: #{tpu_custom_call.1} parent=1 // pred_fallthru
      _
    // Predicated region
    $region6: #{tpu_custom_call.1} parent=1 // pred_check
      _
    $region7: #{tpu_custom_call.1} parent=1 // pred_check_branch
      %17 = sbr.rel (0) target = $region9
    $region8: #{tpu_custom_call.1} parent=1 // pred_region
      %s19 = ssub.s32 384, 384
      %20 = vsyncadd [#allocation3], %s19
      %s21 = sshll.u32 [#allocation2], 4
      %s22 = int_to_ptr.vmem [resolvable:$true] %s21
      %27 = dma.hbm_to_vmem [thread:$0]  %s1, 384, %s22, [#allocation3], 128, 128, 8
    $region9: #{tpu_custom_call.1} parent=1 // pred_fallthru
      _
    // Predicated region
    $region10: #{tpu_custom_call.1} parent=1 // pred_check
      _
    $region11: #{tpu_custom_call.1} parent=1 // pred_check_branch
      %29 = sbr.rel (0) target = $region13
    $region12: #{tpu_custom_call.1} parent=1 // pred_region
      _
    $region13: #{tpu_custom_call.1} parent=1 // pred_fallthru
      _
    // Predicated region
    $region14: #{tpu_custom_call.1} parent=1 // pred_check
      _
    $region15: #{tpu_custom_call.1} parent=1 // pred_check_branch
      %31 = sbr.rel (0) target = $region17
    $region16: #{tpu_custom_call.1} parent=1 // pred_region
      _
    $region17: #{tpu_custom_call.1} parent=1 // pred_fallthru
      _
    // Predicated region
    $region18: #{tpu_custom_call.1} parent=1 // pred_check
      _
    $region19: #{tpu_custom_call.1} parent=1 // pred_check_branch
      %33 = sbr.rel (0) target = $region21
    $region20: #{tpu_custom_call.1} parent=1 // pred_region
      %s35 = ssub.s32 16, 16
      %36 = vsyncadd [#allocation5], %s35
      %s38 = sshll.u32 [#allocation4], 4
      %s39 = int_to_ptr.vmem [resolvable:$true] %s38
      %41 = dma.hbm_to_vmem [thread:$0]  %s4, 16, %s39, [#allocation5]
    $region21: #{tpu_custom_call.1} parent=1 // pred_fallthru
      _
    // Predicated region
    $region22: #{tpu_custom_call.1} parent=1 // pred_check
      _
    $region23: #{tpu_custom_call.1} parent=1 // pred_check_branch
      %43 = sbr.rel (0) target = $region25
    $region24: #{tpu_custom_call.1} parent=1 // pred_region
      _
    $region25: #{tpu_custom_call.1} parent=1 // pred_fallthru
      _
    // Predicated region
    $region26: #{tpu_custom_call.1} parent=1 // pred_check
      _
    $region27: #{tpu_custom_call.1} parent=1 // pred_check_branch
      %45 = sbr.rel (0) target = $region29
    $region28: #{tpu_custom_call.1} parent=1 // pred_region
      _
    $region29: #{tpu_custom_call.1} parent=1 // pred_fallthru
      _
    // Predicated region
    $region30: #{tpu_custom_call.1} parent=1 // pred_check
      _
    $region31: #{tpu_custom_call.1} parent=1 // pred_check_branch
      %47 = sbr.rel (0) target = $region33
    $region32: #{tpu_custom_call.1} parent=1 // pred_region
      %48 = dma.done [#allocation3], 384
    $region33: #{tpu_custom_call.1} parent=1 // pred_fallthru
      _
    // Predicated region
    $region34: #{tpu_custom_call.1} parent=1 // pred_check
      _
    $region35: #{tpu_custom_call.1} parent=1 // pred_check_branch
      %50 = sbr.rel (0) target = $region37
    $region36: #{tpu_custom_call.1} parent=1 // pred_region
      %51 = dma.done [#allocation5], 16
    $region37: #{tpu_custom_call.1} parent=1 // pred_fallthru
      _
    %v52 = vld [vmem:[%s0] sm:$0xff]
    %v53 = vld [vmem:[#allocation2] sm:$0xff]
    %v54 = vld [vmem:[#allocation2 + $0x8] sm:$0xff]
    %v55 = vld [vmem:[#allocation2 + $0x10] sm:$0xff]
    %v56 = vld [vmem:[%s2] sm:$0x1]
    %v58 = vlaneseq
    %v59 = vshrl.u32 %v58, 7
    %v60 = vsub.s32 0, %v59
    %v61 = vrot.slane %v56, %v60
    %vm63 = vcmask 195584
    %v65 = vsel %vm63, %v52, 0
    %67 = vmatprep.subr.mxu0 0.0
    %68 = vmatpush1.msra.mxu0 0.0
    %69 = vmatprep.subr.mxu0 0.0
    %70 = vmatpush1.msra.mxu0 0.0
    %71 = vmatprep.subr.mxu0 0.0
    %72 = vmatpush1.msra.mxu0 0.0
    %73 = vmatprep.subr.mxu0 0.0
    %74 = vmatpush1.msra.mxu0 0.0
    %75 = vmatprep.subr.mxu0 0.0
    %76 = vmatpush1.msra.mxu0 0.0
    %77 = vmatprep.subr.mxu0 0.0
    %78 = vmatpush1.msra.mxu0 0.0
    %79 = vmatprep.subr.mxu0 0.0
    %80 = vmatpush1.msra.mxu0 0.0
    %81 = vmatprep.subr.mxu0 0.0
    %82 = vmatpush1.msra.mxu0 0.0
    %83 = vmatprep.subr.mxu0 0.0
    %84 = vmatpush1.msra.mxu0 0.0
    %85 = vmatprep.subr.mxu0 0.0
    %86 = vmatpush1.msra.mxu0 0.0
    %87 = vmatprep.subr.mxu0 0.0
    %88 = vmatpush1.msra.mxu0 0.0
    %89 = vmatprep.subr.mxu0 0.0
    %90 = vmatpush1.msra.mxu0 0.0
    %91 = vmatprep.subr.mxu0 0.0
    %92 = vmatpush1.msra.mxu0 0.0
    %93 = vmatprep.subr.mxu0 0.0
    %94 = vmatpush1.msra.mxu0 %v55
    %95 = vmatprep.subr.mxu0 0.0
    %96 = vmatpush1.msra.mxu0 %v54
    %97 = vmatprep.subr.mxu0 0.0
    %98 = vmatpush1.msra.mxu0 %v53
    %99 = vmatprep.subr.mxu0 0.0
    %100 = vmatpush2.msra.mxu0 0.0
    %101 = vmatprep.subr.mxu0 0.0
    %102 = vmatpush2.msra.mxu0 0.0
    %103 = vmatprep.subr.mxu0 0.0
    %104 = vmatpush2.msra.mxu0 0.0
    %105 = vmatprep.subr.mxu0 0.0
    %106 = vmatpush2.msra.mxu0 0.0
    %107 = vmatprep.subr.mxu0 0.0
    %108 = vmatpush2.msra.mxu0 0.0
    %109 = vmatprep.subr.mxu0 0.0
    %110 = vmatpush2.msra.mxu0 0.0
    %111 = vmatprep.subr.mxu0 0.0
    %112 = vmatpush2.msra.mxu0 0.0
    %113 = vmatprep.subr.mxu0 0.0
    %114 = vmatpush2.msra.mxu0 0.0
    %115 = vmatprep.subr.mxu0 0.0
    %116 = vmatpush2.msra.mxu0 0.0
    %117 = vmatprep.subr.mxu0 0.0
    %118 = vmatpush2.msra.mxu0 0.0
    %119 = vmatprep.subr.mxu0 0.0
    %120 = vmatpush2.msra.mxu0 0.0
    %121 = vmatprep.subr.mxu0 0.0
    %122 = vmatpush2.msra.mxu0 0.0
    %123 = vmatprep.subr.mxu0 0.0
    %124 = vmatpush2.msra.mxu0 0.0
    %125 = vmatprep.subr.mxu0 0.0
    %126 = vmatpush2.msra.mxu0 0.0
    %127 = vmatprep.subr.mxu0 0.0
    %128 = vmatpush2.msra.mxu0 0.0
    %129 = vmatprep.subr.mxu0 0.0
    %130 = vmatpush2.msra.mxu0 0.0
    %131 = vmatprep.mubr.f32.mxu0 0.0
    %132 = vmatmul.mubr.f32.gmra.mxu0 %v65
    %v133 = vpop.f32.mrf.mxu0
    %v134 = vadd.f32 %v61, %v133
    %v135 = vpop.f32.mrf.mxu0
    %136 = vdwg.mxu0
    %v137 = vmax.f32 %v134, 0.0
    %v138 = vld [vmem:[%s3] sm:$0xff]
    %v139 = vld [vmem:[%s3 + $0x8] sm:$0xff]
    %v140 = vld [vmem:[%s3 + $0x10] sm:$0xff]
    %v141 = vld [vmem:[%s3 + $0x18] sm:$0xff]
    %v142 = vld [vmem:[%s3 + $0x20] sm:$0xff]
    %v143 = vld [vmem:[%s3 + $0x28] sm:$0xff]
    %v144 = vld [vmem:[%s3 + $0x30] sm:$0xff]
    %v145 = vld [vmem:[%s3 + $0x38] sm:$0xff]
    %v146 = vld [vmem:[%s3 + $0x40] sm:$0xff]
    %v147 = vld [vmem:[%s3 + $0x48] sm:$0xff]
    %v148 = vld [vmem:[%s3 + $0x50] sm:$0xff]
    %v149 = vld [vmem:[%s3 + $0x58] sm:$0xff]
    %v150 = vld [vmem:[%s3 + $0x60] sm:$0xff]
    %v151 = vld [vmem:[%s3 + $0x68] sm:$0xff]
    %v152 = vld [vmem:[%s3 + $0x70] sm:$0xff]
    %v153 = vld [vmem:[%s3 + $0x78] sm:$0xff]
    %v154 = vld [vmem:[#allocation4] sm:$0x1]
    %v156 = vlaneseq
    %v157 = vshrl.u32 %v156, 7
    %v158 = vsub.s32 0, %v157
    %v159 = vrot.slane %v154, %v158
    %161 = vmatprep.subr.mxu0 0.0
    %162 = vmatpush1.msra.mxu0 %v153
    %163 = vmatprep.subr.mxu0 0.0
    %164 = vmatpush1.msra.mxu0 %v152
    %165 = vmatprep.subr.mxu0 0.0
    %166 = vmatpush1.msra.mxu0 %v151
    %167 = vmatprep.subr.mxu0 0.0
    %168 = vmatpush1.msra.mxu0 %v150
    %169 = vmatprep.subr.mxu0 0.0
    %170 = vmatpush1.msra.mxu0 %v149
    %171 = vmatprep.subr.mxu0 0.0
    %172 = vmatpush1.msra.mxu0 %v148
    %173 = vmatprep.subr.mxu0 0.0
    %174 = vmatpush1.msra.mxu0 %v147
    %175 = vmatprep.subr.mxu0 0.0
    %176 = vmatpush1.msra.mxu0 %v146
    %177 = vmatprep.subr.mxu0 0.0
    %178 = vmatpush1.msra.mxu0 %v145
    %179 = vmatprep.subr.mxu0 0.0
    %180 = vmatpush1.msra.mxu0 %v144
    %181 = vmatprep.subr.mxu0 0.0
    %182 = vmatpush1.msra.mxu0 %v143
    %183 = vmatprep.subr.mxu0 0.0
    %184 = vmatpush1.msra.mxu0 %v142
    %185 = vmatprep.subr.mxu0 0.0
    %186 = vmatpush1.msra.mxu0 %v141
    %187 = vmatprep.subr.mxu0 0.0
    %188 = vmatpush1.msra.mxu0 %v140
    %189 = vmatprep.subr.mxu0 0.0
    %190 = vmatpush1.msra.mxu0 %v139
    %191 = vmatprep.subr.mxu0 0.0
    %192 = vmatpush1.msra.mxu0 %v138
    %193 = vmatprep.subr.mxu0 0.0
    %194 = vmatpush2.msra.mxu0 0.0
    %195 = vmatprep.subr.mxu0 0.0
    %196 = vmatpush2.msra.mxu0 0.0
    %197 = vmatprep.subr.mxu0 0.0
    %198 = vmatpush2.msra.mxu0 0.0
    %199 = vmatprep.subr.mxu0 0.0
    %200 = vmatpush2.msra.mxu0 0.0
    %201 = vmatprep.subr.mxu0 0.0
    %202 = vmatpush2.msra.mxu0 0.0
    %203 = vmatprep.subr.mxu0 0.0
    %204 = vmatpush2.msra.mxu0 0.0
    %205 = vmatprep.subr.mxu0 0.0
    %206 = vmatpush2.msra.mxu0 0.0
    %207 = vmatprep.subr.mxu0 0.0
    %208 = vmatpush2.msra.mxu0 0.0
    %209 = vmatprep.subr.mxu0 0.0
    %210 = vmatpush2.msra.mxu0 0.0
    %211 = vmatprep.subr.mxu0 0.0
    %212 = vmatpush2.msra.mxu0 0.0
    %213 = vmatprep.subr.mxu0 0.0
    %214 = vmatpush2.msra.mxu0 0.0
    %215 = vmatprep.subr.mxu0 0.0
    %216 = vmatpush2.msra.mxu0 0.0
    %217 = vmatprep.subr.mxu0 0.0
    %218 = vmatpush2.msra.mxu0 0.0
    %219 = vmatprep.subr.mxu0 0.0
    %220 = vmatpush2.msra.mxu0 0.0
    %221 = vmatprep.subr.mxu0 0.0
    %222 = vmatpush2.msra.mxu0 0.0
    %223 = vmatprep.subr.mxu0 0.0
    %224 = vmatpush2.msra.mxu0 0.0
    %225 = vmatprep.mubr.f32.mxu0 0.0
    %226 = vmatmul.mubr.f32.gmra.mxu0 %v137
    %v227 = vpop.f32.mrf.mxu0
    %v228 = vadd.f32 %v159, %v227
    %v229 = vpop.f32.mrf.mxu0
    %230 = vdwg.mxu0
    %v231 = vmax.f32 %v228, 0.0
    %v232 = vld [vmem:[%s5] sm:$0xff]
    %v233 = vld [vmem:[%s5 + $0x8] sm:$0xff]
    %v234 = vld [vmem:[%s5 + $0x10] sm:$0xff]
    %v235 = vld [vmem:[%s5 + $0x18] sm:$0xff]
    %v236 = vld [vmem:[%s5 + $0x20] sm:$0xff]
    %v237 = vld [vmem:[%s5 + $0x28] sm:$0xff]
    %v238 = vld [vmem:[%s5 + $0x30] sm:$0xff]
    %v239 = vld [vmem:[%s5 + $0x38] sm:$0xff]
    %v240 = vld [vmem:[%s5 + $0x40] sm:$0xff]
    %v241 = vld [vmem:[%s5 + $0x48] sm:$0xff]
    %v242 = vld [vmem:[%s5 + $0x50] sm:$0xff]
    %v243 = vld [vmem:[%s5 + $0x58] sm:$0xff]
    %v244 = vld [vmem:[%s5 + $0x60] sm:$0xff]
    %v245 = vld [vmem:[%s5 + $0x68] sm:$0xff]
    %v246 = vld [vmem:[%s5 + $0x70] sm:$0xff]
    %v247 = vld [vmem:[%s5 + $0x78] sm:$0xff]
    %v248 = vld [vmem:[%s6] sm:$0x1]
    %v250 = vlaneseq
    %v251 = vshrl.u32 %v250, 7
    %v252 = vsub.s32 0, %v251
    %v253 = vrot.slane %v248, %v252
    %255 = vmatprep.subr.mxu0 0.0
    %256 = vmatpush1.msra.mxu0 %v247
    %257 = vmatprep.subr.mxu0 0.0
    %258 = vmatpush1.msra.mxu0 %v246
    %259 = vmatprep.subr.mxu0 0.0
    %260 = vmatpush1.msra.mxu0 %v245
    %261 = vmatprep.subr.mxu0 0.0
    %262 = vmatpush1.msra.mxu0 %v244
    %263 = vmatprep.subr.mxu0 0.0
    %264 = vmatpush1.msra.mxu0 %v243
    %265 = vmatprep.subr.mxu0 0.0
    %266 = vmatpush1.msra.mxu0 %v242
    %267 = vmatprep.subr.mxu0 0.0
    %268 = vmatpush1.msra.mxu0 %v241
    %269 = vmatprep.subr.mxu0 0.0
    %270 = vmatpush1.msra.mxu0 %v240
    %271 = vmatprep.subr.mxu0 0.0
    %272 = vmatpush1.msra.mxu0 %v239
    %273 = vmatprep.subr.mxu0 0.0
    %274 = vmatpush1.msra.mxu0 %v238
    %275 = vmatprep.subr.mxu0 0.0
    %276 = vmatpush1.msra.mxu0 %v237
    %277 = vmatprep.subr.mxu0 0.0
    %278 = vmatpush1.msra.mxu0 %v236
    %279 = vmatprep.subr.mxu0 0.0
    %280 = vmatpush1.msra.mxu0 %v235
    %281 = vmatprep.subr.mxu0 0.0
    %282 = vmatpush1.msra.mxu0 %v234
    %283 = vmatprep.subr.mxu0 0.0
    %284 = vmatpush1.msra.mxu0 %v233
    %285 = vmatprep.subr.mxu0 0.0
    %286 = vmatpush1.msra.mxu0 %v232
    %287 = vmatprep.subr.mxu0 0.0
    %288 = vmatpush2.msra.mxu0 0.0
    %289 = vmatprep.subr.mxu0 0.0
    %290 = vmatpush2.msra.mxu0 0.0
    %291 = vmatprep.subr.mxu0 0.0
    %292 = vmatpush2.msra.mxu0 0.0
    %293 = vmatprep.subr.mxu0 0.0
    %294 = vmatpush2.msra.mxu0 0.0
    %295 = vmatprep.subr.mxu0 0.0
    %296 = vmatpush2.msra.mxu0 0.0
    %297 = vmatprep.subr.mxu0 0.0
    %298 = vmatpush2.msra.mxu0 0.0
    %299 = vmatprep.subr.mxu0 0.0
    %300 = vmatpush2.msra.mxu0 0.0
    %301 = vmatprep.subr.mxu0 0.0
    %302 = vmatpush2.msra.mxu0 0.0
    %303 = vmatprep.subr.mxu0 0.0
    %304 = vmatpush2.msra.mxu0 0.0
    %305 = vmatprep.subr.mxu0 0.0
    %306 = vmatpush2.msra.mxu0 0.0
    %307 = vmatprep.subr.mxu0 0.0
    %308 = vmatpush2.msra.mxu0 0.0
    %309 = vmatprep.subr.mxu0 0.0
    %310 = vmatpush2.msra.mxu0 0.0
    %311 = vmatprep.subr.mxu0 0.0
    %312 = vmatpush2.msra.mxu0 0.0
    %313 = vmatprep.subr.mxu0 0.0
    %314 = vmatpush2.msra.mxu0 0.0
    %315 = vmatprep.subr.mxu0 0.0
    %316 = vmatpush2.msra.mxu0 0.0
    %317 = vmatprep.subr.mxu0 0.0
    %318 = vmatpush2.msra.mxu0 0.0
    %319 = vmatprep.mubr.f32.mxu0 0.0
    %320 = vmatmul.mubr.f32.gmra.mxu0 %v231
    %v321 = vpop.f32.mrf.mxu0
    %v322 = vadd.f32 %v253, %v321
    %v323 = vpop.f32.mrf.mxu0
    %324 = vdwg.mxu0
    %vm325 = vcmask 31744
    %326 = vst.msk [vmem:[%s7] sm:$0xff] %vm325, %v322
    // Predicated region
    $region38: #{tpu_custom_call.1} parent=1 // pred_check
      _
    $region39: #{tpu_custom_call.1} parent=1 // pred_check_branch
      %328 = sbr.rel (0) target = $region41
    $region40: #{tpu_custom_call.1} parent=1 // pred_region
      _
    $region41: #{tpu_custom_call.1} parent=1 // pred_fallthru
      _
    // Predicated region
    $region42: #{tpu_custom_call.1} parent=1 // pred_check
      _
    $region43: #{tpu_custom_call.1} parent=1 // pred_check_branch
      %330 = sbr.rel (0) target = $region45
    $region44: #{tpu_custom_call.1} parent=1 // pred_region
      _
    $region45: #{tpu_custom_call.1} parent=1 // pred_fallthru
      _
    %331 = vsyncpa [#allocation3], 1
    %332 = vsyncpa [#allocation5], 1

</llo_original>
